<compile_context>
chip_gen: v6e
topology: v6e:2x2x1
jax: 0.10.0
libtpu: 0.0.40
codegen_flags: <defaults>
</compile_context>

<pallas_src>
import jax
import jax.numpy as jnp
from jax import lax
from jax.experimental import pallas as pl
from jax.experimental.pallas import tpu as pltpu


def _round_up(n, m):
    return ((n + m - 1) // m) * m


def sas_kernel(x_ref,
               w1_ref, b1_ref,
               w2_ref, b2_ref,
               w3_ref, b3_ref,
               w4_ref, b4_ref,
               o_ref):
    """Fused MLP on one batch tile.  Hidden activations are (features, batch_tile): batch on lanes."""
    # Layer 1: contract in_dim of W1 (h1, in) with in_dim of the x tile (bt, in) -> (h1, bt).
    # The x-tile transpose is folded into the dot (XLU/MXU feed); no wrapper transpose needed.
    x = x_ref[...].astype(jnp.bfloat16)                                    # (bt, in)
    h = lax.dot_general(w1_ref[...], x,
                        dimension_numbers=(((1,), (1,)), ((), ())),
                        preferred_element_type=jnp.float32) + b1_ref[...]
    h = jnp.maximum(h, 0.0)                                                # (h1, bt) fp32

    h = jnp.dot(w2_ref[...], h.astype(jnp.bfloat16),
                preferred_element_type=jnp.float32) + b2_ref[...]
    h = jnp.maximum(h, 0.0)                                                # (h2, bt) fp32

    h = jnp.dot(w3_ref[...], h.astype(jnp.bfloat16),
                preferred_element_type=jnp.float32) + b3_ref[...]
    h = jnp.maximum(h, 0.0)                                                # (h3, bt) fp32

    # Layer 4 (out_features == 1): VPU multiply + sublane reduction, skipping the M=1 MXU pass.
    logit = jnp.sum(h * w4_ref[...], axis=0, keepdims=True) + b4_ref[...]  # (1, bt)
    o_ref[...] = jax.nn.sigmoid(logit).astype(o_ref.dtype)                 # lane-dense store


def sas_forward(x, params, *, batch_tile=2048, core_parallel=False):
    """x: (B, 2*state_dim + action_dim); params in PyTorch layout: w (out, in), b (out,)."""
    (w1, b1), (w2, b2), (w3, b3), (w4, b4) = params
    B, in_dim = x.shape
    hidden = w1.shape[0]

    # --- batch tile selection ------------------------------------------------------------------
    b128 = _round_up(B, 128)                       # lane-aligned batch
    bt = min(_round_up(batch_tile, 128), b128)
    if b128 >= 256 and b128 // bt < 2:             # keep >=2 grid steps when the batch allows it
        bt = _round_up(pl.cdiv(b128, 2), 128)
    B_pad = _round_up(B, bt)

    # Pad batch rows only when needed (no transpose, no relayout of x in the wrapper).
    x_in = x if B_pad == B else jnp.pad(x, ((0, B_pad - B), (0, 0)))

    # Weights -> bf16 once (MXU operands); biases stay fp32 (added to the fp32 accumulator).
    w1b, w2b, w3b = (w.astype(jnp.bfloat16) for w in (w1, w2, w3))

    def col(b):   # bias as an (out, 1) column: broadcasts over lanes (batch) in-kernel
        return b.reshape(-1, 1)

    w4_col = w4.reshape(-1, 1)                     # (hidden, 1) fp32 for the VPU reduce
    b4_col = b4.reshape(1, 1)

    grid = (B_pad // bt,)

    def full(shape):  # weights/biases: full-array block, resident across all grid steps
        return pl.BlockSpec(shape, lambda i: (0, 0))

    sem = pltpu.CORE_PARALLEL if core_parallel else "parallel"

    out = pl.pallas_call(
        sas_kernel,
        out_shape=jax.ShapeDtypeStruct((1, B_pad), x.dtype),
        grid_spec=pltpu.PrefetchScalarGridSpec(
            num_scalar_prefetch=0,
            grid=grid,
            in_specs=[
                pl.BlockSpec((bt, in_dim), lambda i: (i, 0)),   # x tile (rows on sublanes)
                full(w1b.shape), full((hidden, 1)),
                full(w2b.shape), full((w2.shape[0], 1)),
                full(w3b.shape), full((w3.shape[0], 1)),
                full((hidden, 1)), full((1, 1)),
            ],
            out_specs=pl.BlockSpec((1, bt), lambda i: (0, i)),
        ),
        compiler_params=pltpu.CompilerParams(dimension_semantics=(sem,)),
    )(x_in, w1b, col(b1), w2b, col(b2), w3b, col(b3), w4_col, b4_col)

    # strip batch padding and restore the PyTorch output shape (B, 1)
    return out[0, :B].reshape(B, 1)


def init_params(key, state_dim, action_dim, hidden_dim, dtype=jnp.float32):
    """PyTorch-style uniform(+-1/sqrt(fan_in)) init.  Weights in PyTorch layout (out, in)."""
    in_dim = 2 * state_dim + action_dim
    dims = [(hidden_dim, in_dim),
            (hidden_dim * 2, hidden_dim),
            (hidden_dim, hidden_dim * 2),
            (1, hidden_dim)]
    params = []
    for (fan_out, fan_in) in dims:
        key, kw, kb = jax.random.split(key, 3)
        bound = 1.0 / (fan_in ** 0.5)
        w = jax.random.uniform(kw, (fan_out, fan_in), dtype, -bound, bound)
        b = jax.random.uniform(kb, (fan_out,), dtype, -bound, bound)
        params.append((w, b))
    return params


def sas_reference(x, params):
    """Pure-JAX fp32 reference (mirrors the PyTorch module) for the correctness check."""
    (w1, b1), (w2, b2), (w3, b3), (w4, b4) = params
    h = jnp.maximum(x @ w1.T + b1, 0.0)
    h = jnp.maximum(h @ w2.T + b2, 0.0)
    h = jnp.maximum(h @ w3.T + b3, 0.0)
    return jax.nn.sigmoid(h @ w4.T + b4)


if __name__ == "__main__":
    state_dim, action_dim, hidden_dim = 8, 4, 32
    batch = 16  # deliberately NOT a multiple of the tile: exercises the row-padding path

    key = jax.random.PRNGKey(0)
    key, kx = jax.random.split(key)
    params = init_params(key, state_dim, action_dim, hidden_dim)

    in_dim = 2 * state_dim + action_dim
    sas_input = jax.random.normal(kx, (batch, in_dim), jnp.float32)

    out = sas_forward(sas_input, params)
    out = jax.block_until_ready(out)

    ref = sas_reference(sas_input, params)
    assert out.shape == (batch, 1)
    # bf16 matmul operands (fp32 accumulate) -> relaxed tolerance vs the fp32 reference
    assert jnp.allclose(out, ref, atol=2e-2, rtol=2e-2)

    print("KERNEL_OK")
</pallas_src>

<mosaic_0001>
module attributes {stable_mosaic.version = 11 : i64} {
  func.func @sas_kernel(%arg0: i32, %arg1: memref<128x20xf32, #tpu.memory_space<vmem>>, %arg2: memref<32x20xbf16, #tpu.memory_space<vmem>>, %arg3: memref<32x1xf32, #tpu.memory_space<vmem>>, %arg4: memref<64x32xbf16, #tpu.memory_space<vmem>>, %arg5: memref<64x1xf32, #tpu.memory_space<vmem>>, %arg6: memref<32x64xbf16, #tpu.memory_space<vmem>>, %arg7: memref<32x1xf32, #tpu.memory_space<vmem>>, %arg8: memref<32x1xf32, #tpu.memory_space<vmem>>, %arg9: memref<1x1xf32, #tpu.memory_space<vmem>>, %arg10: memref<1x128xf32, #tpu.memory_space<vmem>>) attributes {dimension_semantics = [#tpu.dimension_semantics<parallel>], iteration_bounds = array<i64: 1>, scalar_prefetch = 0 : i64, scratch_operands = 0 : i64, tpu.core_type = #tpu.core_type<tc>, window_params = [{transform_indices = @transform_0, window_bounds = array<i64: 128, 20>}, {pipeline_mode = #tpu.pipeline_mode<synchronous>, transform_indices = @transform_1, window_bounds = array<i64: 32, 20>}, {pipeline_mode = #tpu.pipeline_mode<synchronous>, transform_indices = @transform_2, window_bounds = array<i64: 32, 1>}, {pipeline_mode = #tpu.pipeline_mode<synchronous>, transform_indices = @transform_3, window_bounds = array<i64: 64, 32>}, {pipeline_mode = #tpu.pipeline_mode<synchronous>, transform_indices = @transform_4, window_bounds = array<i64: 64, 1>}, {pipeline_mode = #tpu.pipeline_mode<synchronous>, transform_indices = @transform_5, window_bounds = array<i64: 32, 64>}, {pipeline_mode = #tpu.pipeline_mode<synchronous>, transform_indices = @transform_6, window_bounds = array<i64: 32, 1>}, {pipeline_mode = #tpu.pipeline_mode<synchronous>, transform_indices = @transform_7, window_bounds = array<i64: 32, 1>}, {pipeline_mode = #tpu.pipeline_mode<synchronous>, transform_indices = @transform_8, window_bounds = array<i64: 1, 1>}, {transform_indices = @transform_9, window_bounds = array<i64: 1, 128>}]} {
    %c0 = arith.constant 0 : index
    %c0_0 = arith.constant 0 : index
    %0 = vector.load %arg1[%c0, %c0_0] : memref<128x20xf32, #tpu.memory_space<vmem>>, vector<128x20xf32>
    %1 = arith.truncf %0 : vector<128x20xf32> to vector<128x20xbf16>
    %c0_1 = arith.constant 0 : index
    %c0_2 = arith.constant 0 : index
    %2 = vector.load %arg2[%c0_1, %c0_2] : memref<32x20xbf16, #tpu.memory_space<vmem>>, vector<32x20xbf16>
    %cst = arith.constant dense<0.000000e+00> : vector<32x128xf32>
    %3 = tpu.matmul %2, %1, %cst {dimension_numbers = #tpu.dot_dimension_numbers<[1], [1], [0], [0], [0, 0, 1, 0], [], []>} : vector<32x20xbf16>, vector<128x20xbf16>, vector<32x128xf32> -> vector<32x128xf32>
    %c0_3 = arith.constant 0 : index
    %c0_4 = arith.constant 0 : index
    %4 = vector.load %arg3[%c0_3, %c0_4] : memref<32x1xf32, #tpu.memory_space<vmem>>, vector<32x1xf32>
    %5 = vector.broadcast %4 : vector<32x1xf32> to vector<32x128xf32>
    %6 = arith.addf %3, %5 : vector<32x128xf32>
    %cst_5 = arith.constant 0.000000e+00 : f32
    %7 = vector.broadcast %cst_5 : f32 to vector<32x128xf32>
    %8 = arith.maximumf %6, %7 : vector<32x128xf32>
    %c0_6 = arith.constant 0 : index
    %c0_7 = arith.constant 0 : index
    %9 = vector.load %arg4[%c0_6, %c0_7] : memref<64x32xbf16, #tpu.memory_space<vmem>>, vector<64x32xbf16>
    %10 = arith.truncf %8 : vector<32x128xf32> to vector<32x128xbf16>
    %cst_8 = arith.constant dense<0.000000e+00> : vector<64x128xf32>
    %11 = tpu.matmul %9, %10, %cst_8 {dimension_numbers = #tpu.dot_dimension_numbers<[1], [0], [0], [1], [0, 0, 1, 1], [], []>} : vector<64x32xbf16>, vector<32x128xbf16>, vector<64x128xf32> -> vector<64x128xf32>
    %c0_9 = arith.constant 0 : index
    %c0_10 = arith.constant 0 : index
    %12 = vector.load %arg5[%c0_9, %c0_10] : memref<64x1xf32, #tpu.memory_space<vmem>>, vector<64x1xf32>
    %13 = vector.broadcast %12 : vector<64x1xf32> to vector<64x128xf32>
    %14 = arith.addf %11, %13 : vector<64x128xf32>
    %cst_11 = arith.constant 0.000000e+00 : f32
    %15 = vector.broadcast %cst_11 : f32 to vector<64x128xf32>
    %16 = arith.maximumf %14, %15 : vector<64x128xf32>
    %c0_12 = arith.constant 0 : index
    %c0_13 = arith.constant 0 : index
    %17 = vector.load %arg6[%c0_12, %c0_13] : memref<32x64xbf16, #tpu.memory_space<vmem>>, vector<32x64xbf16>
    %18 = arith.truncf %16 : vector<64x128xf32> to vector<64x128xbf16>
    %cst_14 = arith.constant dense<0.000000e+00> : vector<32x128xf32>
    %19 = tpu.matmul %17, %18, %cst_14 {dimension_numbers = #tpu.dot_dimension_numbers<[1], [0], [0], [1], [0, 0, 1, 1], [], []>} : vector<32x64xbf16>, vector<64x128xbf16>, vector<32x128xf32> -> vector<32x128xf32>
    %c0_15 = arith.constant 0 : index
    %c0_16 = arith.constant 0 : index
    %20 = vector.load %arg7[%c0_15, %c0_16] : memref<32x1xf32, #tpu.memory_space<vmem>>, vector<32x1xf32>
    %21 = vector.broadcast %20 : vector<32x1xf32> to vector<32x128xf32>
    %22 = arith.addf %19, %21 : vector<32x128xf32>
    %cst_17 = arith.constant 0.000000e+00 : f32
    %23 = vector.broadcast %cst_17 : f32 to vector<32x128xf32>
    %24 = arith.maximumf %22, %23 : vector<32x128xf32>
    %c0_18 = arith.constant 0 : index
    %c0_19 = arith.constant 0 : index
    %25 = vector.load %arg8[%c0_18, %c0_19] : memref<32x1xf32, #tpu.memory_space<vmem>>, vector<32x1xf32>
    %26 = vector.broadcast %25 : vector<32x1xf32> to vector<32x128xf32>
    %27 = arith.mulf %24, %26 : vector<32x128xf32>
    %cst_20 = arith.constant dense<0.000000e+00> : vector<128xf32>
    %28 = vector.multi_reduction <add>, %27, %cst_20 [0] : vector<32x128xf32> to vector<128xf32>
    %29 = vector.shape_cast %28 : vector<128xf32> to vector<1x128xf32>
    %c0_21 = arith.constant 0 : index
    %c0_22 = arith.constant 0 : index
    %30 = vector.load %arg9[%c0_21, %c0_22] : memref<1x1xf32, #tpu.memory_space<vmem>>, vector<1x1xf32>
    %31 = vector.broadcast %30 : vector<1x1xf32> to vector<1x128xf32>
    %32 = arith.addf %29, %31 : vector<1x128xf32>
    %33 = arith.negf %32 : vector<1x128xf32>
    %34 = math.exp %33 : vector<1x128xf32>
    %cst_23 = arith.constant 1.000000e+00 : f32
    %35 = vector.broadcast %cst_23 : f32 to vector<1x128xf32>
    %36 = arith.addf %35, %34 : vector<1x128xf32>
    %37 = arith.divf %35, %36 : vector<1x128xf32>
    %c0_24 = arith.constant 0 : index
    %c0_25 = arith.constant 0 : index
    %38 = vector.load %arg10[%c0_24, %c0_25] : memref<1x128xf32, #tpu.memory_space<vmem>>, vector<1x128xf32>
    tpu.vector_store %arg10[%c0_24, %c0_25], %37 {strides = array<i32>} : memref<1x128xf32, #tpu.memory_space<vmem>>, vector<1x128xf32>,
    return
  }
  func.func @transform_0(%arg0: i32) -> (i32, i32) {
    %c0_i32 = arith.constant 0 : i32
    %c0_i32_0 = arith.constant 0 : i32
    return %arg0, %c0_i32 : i32, i32
  }
  func.func @transform_1(%arg0: i32) -> (i32, i32) {
    %c0_i32 = arith.constant 0 : i32
    %c0_i32_0 = arith.constant 0 : i32
    %c0_i32_1 = arith.constant 0 : i32
    return %c0_i32, %c0_i32_0 : i32, i32
  }
  func.func @transform_2(%arg0: i32) -> (i32, i32) {
    %c0_i32 = arith.constant 0 : i32
    %c0_i32_0 = arith.constant 0 : i32
    %c0_i32_1 = arith.constant 0 : i32
    return %c0_i32, %c0_i32_0 : i32, i32
  }
  func.func @transform_3(%arg0: i32) -> (i32, i32) {
    %c0_i32 = arith.constant 0 : i32
    %c0_i32_0 = arith.constant 0 : i32
    %c0_i32_1 = arith.constant 0 : i32
    return %c0_i32, %c0_i32_0 : i32, i32
  }
  func.func @transform_4(%arg0: i32) -> (i32, i32) {
    %c0_i32 = arith.constant 0 : i32
    %c0_i32_0 = arith.constant 0 : i32
    %c0_i32_1 = arith.constant 0 : i32
    return %c0_i32, %c0_i32_0 : i32, i32
  }
  func.func @transform_5(%arg0: i32) -> (i32, i32) {
    %c0_i32 = arith.constant 0 : i32
    %c0_i32_0 = arith.constant 0 : i32
    %c0_i32_1 = arith.constant 0 : i32
    return %c0_i32, %c0_i32_0 : i32, i32
  }
  func.func @transform_6(%arg0: i32) -> (i32, i32) {
    %c0_i32 = arith.constant 0 : i32
    %c0_i32_0 = arith.constant 0 : i32
    %c0_i32_1 = arith.constant 0 : i32
    return %c0_i32, %c0_i32_0 : i32, i32
  }
  func.func @transform_7(%arg0: i32) -> (i32, i32) {
    %c0_i32 = arith.constant 0 : i32
    %c0_i32_0 = arith.constant 0 : i32
    %c0_i32_1 = arith.constant 0 : i32
    return %c0_i32, %c0_i32_0 : i32, i32
  }
  func.func @transform_8(%arg0: i32) -> (i32, i32) {
    %c0_i32 = arith.constant 0 : i32
    %c0_i32_0 = arith.constant 0 : i32
    %c0_i32_1 = arith.constant 0 : i32
    return %c0_i32, %c0_i32_0 : i32, i32
  }
  func.func @transform_9(%arg0: i32) -> (i32, i32) {
    %c0_i32 = arith.constant 0 : i32
    %c0_i32_0 = arith.constant 0 : i32
    return %c0_i32, %arg0 : i32, i32
  }
}

</mosaic_0001>

<llo_original>
// kernel: tpu_custom_call.1
$region0: #{tpu_custom_call.1}
  #allocation0 [shape = 'u32[]', space=smem, size = 0x4, offset = 0x4, fixed_abs, tag = 'smem constant byte address 0x4 - core index']
  #allocation1 [shape = 'u32[144,128]{1,0:T(1,128)}', space=vmem, size = 0x12000, scoped, tag = 'internal scratch']
  #allocation2 [shape = 'f32[1,1]{1,0:T(1,128)S(1)}', space=vmem, size = 0x200, scoped, tag = 'scoped memory for tpu_custom_call.1']
  %s0 = inlined_call_operand.vmem [shape: f32[128,20], index: 0, kind: input, shape index: {}]
  %s1 = inlined_call_operand.vmem [shape: bf16[32,20], index: 1, kind: input, shape index: {}]
  %s2 = inlined_call_operand.vmem [shape: f32[32,1], index: 2, kind: input, shape index: {}]
  %s3 = inlined_call_operand.vmem [shape: bf16[64,32], index: 3, kind: input, shape index: {}]
  %s4 = inlined_call_operand.vmem [shape: f32[64,1], index: 4, kind: input, shape index: {}]
  %s5 = inlined_call_operand.vmem [shape: bf16[32,64], index: 5, kind: input, shape index: {}]
  %s6 = inlined_call_operand.vmem [shape: f32[32,1], index: 6, kind: input, shape index: {}]
  %s7 = inlined_call_operand.vmem [shape: f32[32,1], index: 7, kind: input, shape index: {}]
  %s8 = inlined_call_operand.<no memory space> [shape: f32[1,1], index: 8, kind: input, shape index: {}]
  %s9 = inlined_call_operand.hbm [shape: f32[1,128], index: 9, kind: output, shape index: {}]
  %s10 = sld [smem:[#allocation0]]
  $region46: #{tpu_custom_call.1} parent=0
    _
  %s12 = ssub.s32 1, %s10
  %s13 = scalar_select 0, %s12, %s10
  %v14 = vstv %s8
  %15 = vst [vmem:[#allocation2] sm:$0x1] %v14
  $region1: #{tpu_custom_call.1} parent=0
    #allocation3 [shape = 'u8[512]{0}', space=vmem, size = 0x400, scoped, tag = 'output window, operand 0, single buffered']
    #allocation4 [shape = 's32[1]{0}', space=sflag, size = 0x4, scoped, tag = 'scoped memory for tpu_custom_call.1']
    %16 = vsyncpa [#allocation4], 0
    // Predicated region
    $region2: #{tpu_custom_call.1} parent=1 // pred_check
      _
    $region3: #{tpu_custom_call.1} parent=1 // pred_check_branch
      %18 = sbr.rel (0) target = $region5
    $region4: #{tpu_custom_call.1} parent=1 // pred_region
      _
    $region5: #{tpu_custom_call.1} parent=1 // pred_fallthru
      _
    // Predicated region
    $region6: #{tpu_custom_call.1} parent=1 // pred_check
      _
    $region7: #{tpu_custom_call.1} parent=1 // pred_check_branch
      %20 = sbr.rel (0) target = $region9
    $region8: #{tpu_custom_call.1} parent=1 // pred_region
      _
    $region9: #{tpu_custom_call.1} parent=1 // pred_fallthru
      _
    // Predicated region
    $region10: #{tpu_custom_call.1} parent=1 // pred_check
      _
    $region11: #{tpu_custom_call.1} parent=1 // pred_check_branch
      %22 = sbr.rel (0) target = $region13
    $region12: #{tpu_custom_call.1} parent=1 // pred_region
      _
    $region13: #{tpu_custom_call.1} parent=1 // pred_fallthru
      _
    // Predicated region
    $region14: #{tpu_custom_call.1} parent=1 // pred_check
      _
    $region15: #{tpu_custom_call.1} parent=1 // pred_check_branch
      %24 = sbr.rel (0) target = $region17
    $region16: #{tpu_custom_call.1} parent=1 // pred_region
      _
    $region17: #{tpu_custom_call.1} parent=1 // pred_fallthru
      _
    // Predicated region
    $region18: #{tpu_custom_call.1} parent=1 // pred_check
      _
    $region19: #{tpu_custom_call.1} parent=1 // pred_check_branch
      %26 = sbr.rel (0) target = $region21
    $region20: #{tpu_custom_call.1} parent=1 // pred_region
      _
    $region21: #{tpu_custom_call.1} parent=1 // pred_fallthru
      _
    // Predicated region
    $region22: #{tpu_custom_call.1} parent=1 // pred_check
      _
    $region23: #{tpu_custom_call.1} parent=1 // pred_check_branch
      %28 = sbr.rel (0) target = $region25
    $region24: #{tpu_custom_call.1} parent=1 // pred_region
      _
    $region25: #{tpu_custom_call.1} parent=1 // pred_fallthru
      _
    // Predicated region
    $region26: #{tpu_custom_call.1} parent=1 // pred_check
      _
    $region27: #{tpu_custom_call.1} parent=1 // pred_check_branch
      %30 = sbr.rel (0) target = $region29
    $region28: #{tpu_custom_call.1} parent=1 // pred_region
      _
    $region29: #{tpu_custom_call.1} parent=1 // pred_fallthru
      _
    // Predicated region
    $region30: #{tpu_custom_call.1} parent=1 // pred_check
      _
    $region31: #{tpu_custom_call.1} parent=1 // pred_check_branch
      %32 = sbr.rel (0) target = $region33
    $region32: #{tpu_custom_call.1} parent=1 // pred_region
      _
    $region33: #{tpu_custom_call.1} parent=1 // pred_fallthru
      _
    // Predicated region
    $region34: #{tpu_custom_call.1} parent=1 // pred_check
      _
    $region35: #{tpu_custom_call.1} parent=1 // pred_check_branch
      %34 = sbr.rel (0) target = $region37
    $region36: #{tpu_custom_call.1} parent=1 // pred_region
      _
    $region37: #{tpu_custom_call.1} parent=1 // pred_fallthru
      _
    %v36 = vld [vmem:[%s0] sm:$0xff]
    %v37 = vld [vmem:[%s0 + $0x8] sm:$0xff]
    %v38 = vld [vmem:[%s0 + $0x10] sm:$0xff]
    %v39 = vld [vmem:[%s0 + $0x18] sm:$0xff]
    %v40 = vld [vmem:[%s0 + $0x20] sm:$0xff]
    %v41 = vld [vmem:[%s0 + $0x28] sm:$0xff]
    %v42 = vld [vmem:[%s0 + $0x30] sm:$0xff]
    %v43 = vld [vmem:[%s0 + $0x38] sm:$0xff]
    %v44 = vld [vmem:[%s0 + $0x40] sm:$0xff]
    %v45 = vld [vmem:[%s0 + $0x48] sm:$0xff]
    %v46 = vld [vmem:[%s0 + $0x50] sm:$0xff]
    %v47 = vld [vmem:[%s0 + $0x58] sm:$0xff]
    %v48 = vld [vmem:[%s0 + $0x60] sm:$0xff]
    %v49 = vld [vmem:[%s0 + $0x68] sm:$0xff]
    %v50 = vld [vmem:[%s0 + $0x70] sm:$0xff]
    %v51 = vld [vmem:[%s0 + $0x78] sm:$0xff]
    %v52 = vpack.c.bf16 %v37, %v36
    %v53 = vpack.c.bf16 %v39, %v38
    %v54 = vpack.c.bf16 %v41, %v40
    %v55 = vpack.c.bf16 %v43, %v42
    %v56 = vpack.c.bf16 %v45, %v44
    %v57 = vpack.c.bf16 %v47, %v46
    %v58 = vpack.c.bf16 %v49, %v48
    %v59 = vpack.c.bf16 %v51, %v50
    %v60 = vld [vmem:[%s1] sm:$0xf]
    %v61 = vld [vmem:[%s1 + $0x4] sm:$0xf]
    %v62 = vld [vmem:[%s1 + $0x8] sm:$0xf]
    %v63 = vld [vmem:[%s1 + $0xc] sm:$0xf]
    %v64 = vld [vmem:[%s2] sm:$0xff]
    %v65 = vld [vmem:[%s2 + $0x8] sm:$0xff]
    %v66 = vld [vmem:[%s2 + $0x10] sm:$0xff]
    %v67 = vld [vmem:[%s2 + $0x18] sm:$0xff]
    %69 = vset.pattern.permute.xlu0 0
    %70 = vperm.xlu0 %69, %v64
    %v71 = vpop.permute.xlu0 %70
    %74 = vset.pattern.permute.xlu0 0
    %75 = vperm.xlu0 %74, %v65
    %v76 = vpop.permute.xlu0 %75
    %79 = vset.pattern.permute.xlu0 0
    %80 = vperm.xlu0 %79, %v66
    %v81 = vpop.permute.xlu0 %80
    %84 = vset.pattern.permute.xlu0 0
    %85 = vperm.xlu0 %84, %v67
    %v86 = vpop.permute.xlu0 %85
    %v92 = vunpack.c.l.b16 %v60
    %v93 = vunpack.c.l.b16 %v61
    %v94 = vunpack.c.l.b16 %v62
    %v95 = vunpack.c.l.b16 %v63
    %v96 = vpack.c.b16 %v93, %v92
    %v97 = vpack.c.b16 %v95, %v94
    %vm98 = vcmask 162816
    %v100 = vsel %vm98, %v96, 0
    %v103 = vsel %vm98, %v97, 0
    %v106 = vsel %vm98, %v52, 0
    %v109 = vsel %vm98, %v53, 0
    %v112 = vsel %vm98, %v54, 0
    %v115 = vsel %vm98, %v55, 0
    %v118 = vsel %vm98, %v56, 0
    %v121 = vsel %vm98, %v57, 0
    %v124 = vsel %vm98, %v58, 0
    %v127 = vsel %vm98, %v59, 0
    %129 = vmatprep.subr.bf16.mxu0 0
    %130 = vmatpush1.bf16.xpose.msra.mxu0 %v127
    %131 = vmatprep.subr.bf16.mxu0 0
    %132 = vmatpush1.bf16.xpose.msra.mxu0 %v124
    %133 = vmatprep.subr.bf16.mxu0 0
    %134 = vmatpush1.bf16.xpose.msra.mxu0 %v121
    %135 = vmatprep.subr.bf16.mxu0 0
    %136 = vmatpush1.bf16.xpose.msra.mxu0 %v118
    %137 = vmatprep.subr.bf16.mxu0 0
    %138 = vmatpush1.bf16.xpose.msra.mxu0 %v115
    %139 = vmatprep.subr.bf16.mxu0 0
    %140 = vmatpush1.bf16.xpose.msra.mxu0 %v112
    %141 = vmatprep.subr.bf16.mxu0 0
    %142 = vmatpush1.bf16.xpose.msra.mxu0 %v109
    %143 = vmatprep.subr.bf16.mxu0 0
    %144 = vmatpush1.bf16.xpose.msra.mxu0 %v106
    %145 = vmatprep.subr.bf16.mxu0 0
    %146 = vmatpush2.bf16.xpose.msra.mxu0 0
    %147 = vmatprep.subr.bf16.mxu0 0
    %148 = vmatpush2.bf16.xpose.msra.mxu0 0
    %149 = vmatprep.subr.bf16.mxu0 0
    %150 = vmatpush2.bf16.xpose.msra.mxu0 0
    %151 = vmatprep.subr.bf16.mxu0 0
    %152 = vmatpush2.bf16.xpose.msra.mxu0 0
    %153 = vmatprep.subr.bf16.mxu0 0
    %154 = vmatpush2.bf16.xpose.msra.mxu0 0
    %155 = vmatprep.subr.bf16.mxu0 0
    %156 = vmatpush2.bf16.xpose.msra.mxu0 0
    %157 = vmatprep.subr.bf16.mxu0 0
    %158 = vmatpush2.bf16.xpose.msra.mxu0 0
    %159 = vmatprep.subr.bf16.mxu0 0
    %160 = vmatpush2.bf16.xpose.msra.mxu0 0
    %161 = vmatprep.mubr.bf16.mxu0 0
    %162 = vmatmul.mubr.bf16.gmra.mxu0 %v100
    %v163 = vpop.f32.mrf.mxu0
    %v164 = vadd.f32 %v71, %v163
    %v165 = vpop.f32.mrf.mxu0
    %v166 = vpop.f32.mrf.mxu0
    %v167 = vadd.f32 %v76, %v166
    %v168 = vpop.f32.mrf.mxu0
    %169 = vmatprep.mubr.bf16.mxu0 0
    %170 = vmatmul.mubr.bf16.gmra.mxu0 %v103
    %v171 = vpop.f32.mrf.mxu0
    %v172 = vadd.f32 %v81, %v171
    %v173 = vpop.f32.mrf.mxu0
    %v174 = vpop.f32.mrf.mxu0
    %v175 = vadd.f32 %v86, %v174
    %v176 = vpop.f32.mrf.mxu0
    %177 = vdwg.mxu0
    %v178 = vmax.f32 %v164, 0.0
    %v179 = vmax.f32 %v167, 0.0
    %v180 = vmax.f32 %v172, 0.0
    %v181 = vmax.f32 %v175, 0.0
    %v182 = vld [vmem:[%s3] sm:$0xf]
    %v183 = vld [vmem:[%s3 + $0x4] sm:$0xf]
    %v184 = vld [vmem:[%s3 + $0x8] sm:$0xf]
    %v185 = vld [vmem:[%s3 + $0xc] sm:$0xf]
    %v186 = vld [vmem:[%s3 + $0x10] sm:$0xf]
    %v187 = vld [vmem:[%s3 + $0x14] sm:$0xf]
    %v188 = vld [vmem:[%s3 + $0x18] sm:$0xf]
    %v189 = vld [vmem:[%s3 + $0x1c] sm:$0xf]
    %v190 = vpack.c.bf16 %v179, %v178
    %v191 = vpack.c.bf16 %v181, %v180
    %v192 = vld [vmem:[%s4] sm:$0xff]
    %v193 = vld [vmem:[%s4 + $0x8] sm:$0xff]
    %v194 = vld [vmem:[%s4 + $0x10] sm:$0xff]
    %v195 = vld [vmem:[%s4 + $0x18] sm:$0xff]
    %v196 = vld [vmem:[%s4 + $0x20] sm:$0xff]
    %v197 = vld [vmem:[%s4 + $0x28] sm:$0xff]
    %v198 = vld [vmem:[%s4 + $0x30] sm:$0xff]
    %v199 = vld [vmem:[%s4 + $0x38] sm:$0xff]
    %201 = vset.pattern.permute.xlu0 0
    %202 = vperm.xlu0 %201, %v192
    %v203 = vpop.permute.xlu0 %202
    %206 = vset.pattern.permute.xlu0 0
    %207 = vperm.xlu0 %206, %v193
    %v208 = vpop.permute.xlu0 %207
    %211 = vset.pattern.permute.xlu0 0
    %212 = vperm.xlu0 %211, %v194
    %v213 = vpop.permute.xlu0 %212
    %216 = vset.pattern.permute.xlu0 0
    %217 = vperm.xlu0 %216, %v195
    %v218 = vpop.permute.xlu0 %217
    %221 = vset.pattern.permute.xlu0 0
    %222 = vperm.xlu0 %221, %v196
    %v223 = vpop.permute.xlu0 %222
    %226 = vset.pattern.permute.xlu0 0
    %227 = vperm.xlu0 %226, %v197
    %v228 = vpop.permute.xlu0 %227
    %231 = vset.pattern.permute.xlu0 0
    %232 = vperm.xlu0 %231, %v198
    %v233 = vpop.permute.xlu0 %232
    %236 = vset.pattern.permute.xlu0 0
    %237 = vperm.xlu0 %236, %v199
    %v238 = vpop.permute.xlu0 %237
    %v248 = vunpack.c.l.b16 %v182
    %v249 = vunpack.c.l.b16 %v183
    %v250 = vunpack.c.l.b16 %v184
    %v251 = vunpack.c.l.b16 %v185
    %v252 = vunpack.c.l.b16 %v186
    %v253 = vunpack.c.l.b16 %v187
    %v254 = vunpack.c.l.b16 %v188
    %v255 = vunpack.c.l.b16 %v189
    %v256 = vpack.c.b16 %v249, %v248
    %v257 = vpack.c.b16 %v251, %v250
    %v258 = vpack.c.b16 %v253, %v252
    %v259 = vpack.c.b16 %v255, %v254
    %vm260 = vcmask 261120
    %v262 = vsel %vm260, %v256, 0
    %v265 = vsel %vm260, %v257, 0
    %v268 = vsel %vm260, %v258, 0
    %v271 = vsel %vm260, %v259, 0
    %273 = vmatprep.subr.bf16.mxu0 0
    %274 = vmatpush1.bf16.msra.mxu0 0
    %275 = vmatprep.subr.bf16.mxu0 0
    %276 = vmatpush1.bf16.msra.mxu0 0
    %277 = vmatprep.subr.bf16.mxu0 0
    %278 = vmatpush1.bf16.msra.mxu0 0
    %279 = vmatprep.subr.bf16.mxu0 0
    %280 = vmatpush1.bf16.msra.mxu0 0
    %281 = vmatprep.subr.bf16.mxu0 0
    %282 = vmatpush1.bf16.msra.mxu0 0
    %283 = vmatprep.subr.bf16.mxu0 0
    %284 = vmatpush1.bf16.msra.mxu0 0
    %285 = vmatprep.subr.bf16.mxu0 0
    %286 = vmatpush1.bf16.msra.mxu0 %v191
    %287 = vmatprep.subr.bf16.mxu0 0
    %288 = vmatpush1.bf16.msra.mxu0 %v190
    %289 = vmatprep.subr.bf16.mxu0 0
    %290 = vmatpush2.bf16.msra.mxu0 0
    %291 = vmatprep.subr.bf16.mxu0 0
    %292 = vmatpush2.bf16.msra.mxu0 0
    %293 = vmatprep.subr.bf16.mxu0 0
    %294 = vmatpush2.bf16.msra.mxu0 0
    %295 = vmatprep.subr.bf16.mxu0 0
    %296 = vmatpush2.bf16.msra.mxu0 0
    %297 = vmatprep.subr.bf16.mxu0 0
    %298 = vmatpush2.bf16.msra.mxu0 0
    %299 = vmatprep.subr.bf16.mxu0 0
    %300 = vmatpush2.bf16.msra.mxu0 0
    %301 = vmatprep.subr.bf16.mxu0 0
    %302 = vmatpush2.bf16.msra.mxu0 0
    %303 = vmatprep.subr.bf16.mxu0 0
    %304 = vmatpush2.bf16.msra.mxu0 0
    %305 = vmatprep.mubr.bf16.mxu0 0
    %306 = vmatmul.mubr.bf16.gmra.mxu0 %v262
    %v307 = vpop.f32.mrf.mxu0
    %v308 = vadd.f32 %v203, %v307
    %v309 = vpop.f32.mrf.mxu0
    %v310 = vpop.f32.mrf.mxu0
    %v311 = vadd.f32 %v208, %v310
    %v312 = vpop.f32.mrf.mxu0
    %313 = vmatprep.mubr.bf16.mxu0 0
    %314 = vmatmul.mubr.bf16.gmra.mxu0 %v265
    %v315 = vpop.f32.mrf.mxu0
    %v316 = vadd.f32 %v213, %v315
    %v317 = vpop.f32.mrf.mxu0
    %v318 = vpop.f32.mrf.mxu0
    %v319 = vadd.f32 %v218, %v318
    %v320 = vpop.f32.mrf.mxu0
    %321 = vmatprep.mubr.bf16.mxu0 0
    %322 = vmatmul.mubr.bf16.gmra.mxu0 %v268
    %v323 = vpop.f32.mrf.mxu0
    %v324 = vadd.f32 %v223, %v323
    %v325 = vpop.f32.mrf.mxu0
    %v326 = vpop.f32.mrf.mxu0
    %v327 = vadd.f32 %v228, %v326
    %v328 = vpop.f32.mrf.mxu0
    %329 = vmatprep.mubr.bf16.mxu0 0
    %330 = vmatmul.mubr.bf16.gmra.mxu0 %v271
    %v331 = vpop.f32.mrf.mxu0
    %v332 = vadd.f32 %v233, %v331
    %v333 = vpop.f32.mrf.mxu0
    %v334 = vpop.f32.mrf.mxu0
    %v335 = vadd.f32 %v238, %v334
    %v336 = vpop.f32.mrf.mxu0
    %337 = vdwg.mxu0
    %v338 = vmax.f32 %v308, 0.0
    %v339 = vmax.f32 %v311, 0.0
    %v340 = vmax.f32 %v316, 0.0
    %v341 = vmax.f32 %v319, 0.0
    %v342 = vmax.f32 %v324, 0.0
    %v343 = vmax.f32 %v327, 0.0
    %v344 = vmax.f32 %v332, 0.0
    %v345 = vmax.f32 %v335, 0.0
    %v346 = vld [vmem:[%s5] sm:$0xf]
    %v347 = vld [vmem:[%s5 + $0x4] sm:$0xf]
    %v348 = vld [vmem:[%s5 + $0x8] sm:$0xf]
    %v349 = vld [vmem:[%s5 + $0xc] sm:$0xf]
    %v350 = vpack.c.bf16 %v339, %v338
    %v351 = vpack.c.bf16 %v341, %v340
    %v352 = vpack.c.bf16 %v343, %v342
    %v353 = vpack.c.bf16 %v345, %v344
    %v354 = vld [vmem:[%s6] sm:$0xff]
    %v355 = vld [vmem:[%s6 + $0x8] sm:$0xff]
    %v356 = vld [vmem:[%s6 + $0x10] sm:$0xff]
    %v357 = vld [vmem:[%s6 + $0x18] sm:$0xff]
    %359 = vset.pattern.permute.xlu0 0
    %360 = vperm.xlu0 %359, %v354
    %v361 = vpop.permute.xlu0 %360
    %364 = vset.pattern.permute.xlu0 0
    %365 = vperm.xlu0 %364, %v355
    %v366 = vpop.permute.xlu0 %365
    %369 = vset.pattern.permute.xlu0 0
    %370 = vperm.xlu0 %369, %v356
    %v371 = vpop.permute.xlu0 %370
    %374 = vset.pattern.permute.xlu0 0
    %375 = vperm.xlu0 %374, %v357
    %v376 = vpop.permute.xlu0 %375
    %v382 = vunpack.c.l.b16 %v346
    %v383 = vunpack.c.l.b16 %v347
    %v384 = vunpack.c.l.b16 %v348
    %v385 = vunpack.c.l.b16 %v349
    %v386 = vpack.c.b16 %v383, %v382
    %v387 = vpack.c.b16 %v385, %v384
    %vm388 = vcmask 523264
    %v390 = vsel %vm388, %v386, 0
    %v393 = vsel %vm388, %v387, 0
    %395 = vmatprep.subr.bf16.mxu0 0
    %396 = vmatpush1.bf16.msra.mxu0 0
    %397 = vmatprep.subr.bf16.mxu0 0
    %398 = vmatpush1.bf16.msra.mxu0 0
    %399 = vmatprep.subr.bf16.mxu0 0
    %400 = vmatpush1.bf16.msra.mxu0 0
    %401 = vmatprep.subr.bf16.mxu0 0
    %402 = vmatpush1.bf16.msra.mxu0 0
    %403 = vmatprep.subr.bf16.mxu0 0
    %404 = vmatpush1.bf16.msra.mxu0 %v353
    %405 = vmatprep.subr.bf16.mxu0 0
    %406 = vmatpush1.bf16.msra.mxu0 %v352
    %407 = vmatprep.subr.bf16.mxu0 0
    %408 = vmatpush1.bf16.msra.mxu0 %v351
    %409 = vmatprep.subr.bf16.mxu0 0
    %410 = vmatpush1.bf16.msra.mxu0 %v350
    %411 = vmatprep.subr.bf16.mxu0 0
    %412 = vmatpush2.bf16.msra.mxu0 0
    %413 = vmatprep.subr.bf16.mxu0 0
    %414 = vmatpush2.bf16.msra.mxu0 0
    %415 = vmatprep.subr.bf16.mxu0 0
    %416 = vmatpush2.bf16.msra.mxu0 0
    %417 = vmatprep.subr.bf16.mxu0 0
    %418 = vmatpush2.bf16.msra.mxu0 0
    %419 = vmatprep.subr.bf16.mxu0 0
    %420 = vmatpush2.bf16.msra.mxu0 0
    %421 = vmatprep.subr.bf16.mxu0 0
    %422 = vmatpush2.bf16.msra.mxu0 0
    %423 = vmatprep.subr.bf16.mxu0 0
    %424 = vmatpush2.bf16.msra.mxu0 0
    %425 = vmatprep.subr.bf16.mxu0 0
    %426 = vmatpush2.bf16.msra.mxu0 0
    %427 = vmatprep.mubr.bf16.mxu0 0
    %428 = vmatmul.mubr.bf16.gmra.mxu0 %v390
    %v429 = vpop.f32.mrf.mxu0
    %v430 = vadd.f32 %v361, %v429
    %v431 = vpop.f32.mrf.mxu0
    %v432 = vpop.f32.mrf.mxu0
    %v433 = vadd.f32 %v366, %v432
    %v434 = vpop.f32.mrf.mxu0
    %435 = vmatprep.mubr.bf16.mxu0 0
    %436 = vmatmul.mubr.bf16.gmra.mxu0 %v393
    %v437 = vpop.f32.mrf.mxu0
    %v438 = vadd.f32 %v371, %v437
    %v439 = vpop.f32.mrf.mxu0
    %v440 = vpop.f32.mrf.mxu0
    %v441 = vadd.f32 %v376, %v440
    %v442 = vpop.f32.mrf.mxu0
    %443 = vdwg.mxu0
    %v444 = vmax.f32 %v430, 0.0
    %v445 = vmax.f32 %v433, 0.0
    %v446 = vmax.f32 %v438, 0.0
    %v447 = vmax.f32 %v441, 0.0
    %v448 = vld [vmem:[%s7] sm:$0xff]
    %v449 = vld [vmem:[%s7 + $0x8] sm:$0xff]
    %v450 = vld [vmem:[%s7 + $0x10] sm:$0xff]
    %v451 = vld [vmem:[%s7 + $0x18] sm:$0xff]
    %453 = vset.pattern.permute.xlu0 0
    %454 = vperm.xlu0 %453, %v448
    %v455 = vpop.permute.xlu0 %454
    %458 = vset.pattern.permute.xlu0 0
    %459 = vperm.xlu0 %458, %v449
    %v460 = vpop.permute.xlu0 %459
    %463 = vset.pattern.permute.xlu0 0
    %464 = vperm.xlu0 %463, %v450
    %v465 = vpop.permute.xlu0 %464
    %468 = vset.pattern.permute.xlu0 0
    %469 = vperm.xlu0 %468, %v451
    %v470 = vpop.permute.xlu0 %469
    %v472 = vmul.f32 %v444, %v455
    %v473 = vmul.f32 %v445, %v460
    %v474 = vmul.f32 %v446, %v465
    %v475 = vmul.f32 %v447, %v470
    %v476 = vadd.f32 %v472, %v473
    %v477 = vadd.f32 %v476, %v474
    %v478 = vadd.f32 %v477, %v475
    %v479 = vrot.slane %v478, 4
    %v480 = vadd.f32 %v478, %v479
    %v481 = vrot.slane %v480, 2
    %v482 = vadd.f32 %v480, %v481
    %v483 = vrot.slane %v482, 1
    %v484 = vadd.f32 %v482, %v483
    %v485 = vld [vmem:[#allocation2] sm:$0x1]
    %487 = vset.pattern.permute.xlu0 0
    %488 = vperm.xlu0 %487, %v485
    %v489 = vpop.permute.xlu0 %488
    %v491 = vlaneseq
    %v492 = vshrl.u32 %v491, 7
    %v493 = vsub.s32 0, %v492
    %v494 = vrot.slane %v489, %v493
    %v495 = vadd.f32 %v484, %v494
    %v496 = vxor.u32 %v495, 2147483648
    %v497 = vmul.f32 %v496, 1.442695
    %v498 = vpow.pop %v497
    %v499 = vadd.f32 %v498, 1.0
    %v500 = vrcp.pop %v499
    %v501 = vmul.f32 1.0, %v500
    %502 = vst [vmem:[#allocation3] sm:$0x1] %v501
    // Predicated region
    $region38: #{tpu_custom_call.1} parent=1 // pred_check
      _
    $region39: #{tpu_custom_call.1} parent=1 // pred_check_branch
      %504 = sbr.rel (0) target = $region41
    $region40: #{tpu_custom_call.1} parent=1 // pred_region
      %s506 = ssub.s32 16, 16
      %507 = vsyncadd [#allocation4], %s506
      %s509 = sshll.u32 [#allocation3], 4
      %s510 = int_to_ptr.vmem [resolvable:$true] %s509
      %512 = dma.vmem_to_hbm [thread:$0]  %s510, 16, %s9, [#allocation4]
    $region41: #{tpu_custom_call.1} parent=1 // pred_fallthru
      _
    // Predicated region
    $region42: #{tpu_custom_call.1} parent=1 // pred_check
      _
    $region43: #{tpu_custom_call.1} parent=1 // pred_check_branch
      %514 = sbr.rel (0) target = $region45
    $region44: #{tpu_custom_call.1} parent=1 // pred_region
      %515 = dma.done [#allocation4], 16
    $region45: #{tpu_custom_call.1} parent=1 // pred_fallthru
      _
    %516 = vsyncpa [#allocation4], 1

</llo_original>
